<compile_context>
chip_gen: v7x
topology: tpu7x:2x2x1
jax: 0.10.0
libtpu: 0.0.40
codegen_flags: <defaults>
</compile_context>

<pallas_src>
import jax
import jax.numpy as jnp
from jax.experimental import pallas as pl
from jax.experimental.pallas import tpu as pltpu


_LANE = 128
_TV_TARGET = 512     # lm_head vocab tile
_TM_TARGET = 1024    # lm_head M tile target (amortizes the w_lm stream)


def _round_up(x, m):
    return ((x + m - 1) // m) * m


def _vmem_budget_bytes():
    """Per-core scoped-VMEM budget: physical capacity minus headroom."""
    cap = 64 << 20  # conservative fallback (v7x per-TC physical VMEM)
    try:
        info = pltpu.get_tpu_info()
        cap = int(getattr(info, "vmem_capacity_bytes", cap))
    except Exception:
        pass
    # Leave ~12 MiB headroom for compiler scratch; never report below 32 MiB.
    return max(cap - (12 << 20), 32 << 20)


# --------------------------- one-time weight prep ---------------------------

def prepare_lm_head_weight(w_lm, tv_target=_TV_TARGET):
    """Pad the vocab axis to the tile width and cast to bf16 ONCE (store it)."""
    _, V = w_lm.shape
    pad_to = tv_target if V > tv_target else _LANE
    V_pad = _round_up(V, pad_to)
    w = w_lm if V_pad == V else jnp.pad(w_lm, ((0, 0), (0, V_pad - V)))
    return w.astype(jnp.bfloat16)


def prepare_value_head_weights(w1, b1, w2, b2):
    """bf16 w1, 2-D f32 b1, and Dv padded to a full lane for w2 / b2."""
    _, Dv = w2.shape
    DV_PAD = _round_up(Dv, _LANE)
    w1_bf = w1.astype(jnp.bfloat16)
    b1_2d = b1.reshape(1, -1).astype(jnp.float32)
    w2_p = w2 if DV_PAD == Dv else jnp.pad(w2, ((0, 0), (0, DV_PAD - Dv)))
    b2_2d = b2.reshape(1, -1)
    b2_p = b2_2d if DV_PAD == Dv else jnp.pad(b2_2d, ((0, 0), (0, DV_PAD - Dv)))
    return w1_bf, b1_2d, w2_p.astype(jnp.float32), b2_p.astype(jnp.float32)


# ----------------------------- lm_head --------------------------------------

def _lm_head_kernel(h_ref, w_ref, o_ref):
    # h_ref: [TM, H] bf16, w_ref: [H, TV] bf16, o_ref: [TM, TV] out_dtype
    o_ref[...] = jnp.dot(
        h_ref[...], w_ref[...], preferred_element_type=jnp.float32
    ).astype(o_ref.dtype)


def lm_head_pallas(h_bf, w_bf_padded, *, vocab_size,
                   tm_target=_TM_TARGET, tv_target=_TV_TARGET,
                   out_dtype=jnp.float32):
    """logits = h @ W_lm (bias=False).  h_bf: [M, H] bf16, w: [H, V_pad] bf16."""
    M, H = h_bf.shape
    V_pad = w_bf_padded.shape[1]
    TV = min(tv_target, V_pad)
    assert V_pad % TV == 0

    budget = _vmem_budget_bytes()
    out_bytes = jnp.dtype(out_dtype).itemsize

    def footprint(tm):
        # Double-buffered pipeline: 2 live buffers per operand / output.
        return 2 * (tm * H * 2 + H * TV * 2 + tm * TV * out_bytes)

    # TM: multiple of 16 (bf16 sublane pack); shrink until the footprint fits
    # the per-generation budget (v5e/v6e ~116 MiB, v7x ~52 MiB).
    TM = min(tm_target, _round_up(M, 16))
    while TM > 128 and footprint(TM) > budget:
        TM //= 2
    M_pad = _round_up(M, TM)

    h_p = h_bf if M_pad == M else jnp.pad(h_bf, ((0, M_pad - M), (0, 0)))

    grid = (M_pad // TM, V_pad // TV)

    cost = pl.CostEstimate(
        flops=2 * M_pad * H * V_pad,
        transcendentals=0,
        bytes_accessed=(M_pad * H * 2                     # h: once per M tile
                        + (M_pad // TM) * H * V_pad * 2   # w_lm re-streamed
                        + M_pad * V_pad * out_bytes),     # logits write
    )

    logits = pl.pallas_call(
        _lm_head_kernel,
        out_shape=jax.ShapeDtypeStruct((M_pad, V_pad), out_dtype),
        grid=grid,
        in_specs=[
            pl.BlockSpec((TM, H), lambda i, j: (i, 0)),
            pl.BlockSpec((H, TV), lambda i, j: (0, j)),
        ],
        out_specs=pl.BlockSpec((TM, TV), lambda i, j: (i, j)),
        compiler_params=pltpu.CompilerParams(
            dimension_semantics=("parallel", "parallel"),
            vmem_limit_bytes=int(budget),
        ),
        cost_estimate=cost,
    )(h_p, w_bf_padded)

    return logits[:M, :vocab_size]


# ---------------------------- value_head ------------------------------------

def _value_head_kernel(h_ref, w1_ref, b1_ref, w2_ref, b2_ref, v_ref):
    # h_ref: [TM, H] bf16, w1_ref: [H, THh] bf16, b1_ref: [1, THh] f32,
    # w2_ref: [THh, DV_PAD] f32, b2_ref: [1, DV_PAD] f32, v_ref: [TM, DV_PAD] f32
    j = pl.program_id(1)

    # Linear -> ReLU (Dropout(0.1) is identity in eval mode).  ReLU is
    # elementwise over Hh, so chunking Hh and summing z_chunk @ w2_chunk is
    # exact when the Hh axis is tiled.
    z = jnp.dot(h_ref[...], w1_ref[...],
                preferred_element_type=jnp.float32) + b1_ref[...]
    z = jnp.maximum(z, 0.0)
    part = jnp.dot(z, w2_ref[...], preferred_element_type=jnp.float32)

    # Accumulate directly into the resident output tile (block index (i, 0)
    # is constant across j) -- no scratch, bias added exactly once.
    @pl.when(j == 0)
    def _():
        v_ref[...] = (part + b2_ref[...]).astype(v_ref.dtype)

    @pl.when(j > 0)
    def _():
        v_ref[...] = v_ref[...] + part.astype(v_ref.dtype)


def value_head_pallas(h_bf, w1_bf, b1_2d, w2_pad, b2_pad, *, value_dim,
                      tm_target=512):
    """Linear(H, H//2) -> ReLU -> Dropout(identity) -> Linear(H//2, Dv)."""
    M, H = h_bf.shape
    Hh = w1_bf.shape[1]
    DV_PAD = w2_pad.shape[1]

    budget = _vmem_budget_bytes()

    def footprint(tm, thh):
        return 2 * (tm * H * 2 + H * thh * 2 + thh * 4
                    + thh * DV_PAD * 4 + DV_PAD * 4 + tm * DV_PAD * 4)

    TM = min(tm_target, _round_up(M, 16))
    # Prefer a single-shot Hh (no reduction grid / no accumulator round-trips);
    # tile Hh (multiples of 128) only if w1's slice would blow the budget.
    THh = Hh
    while THh > 256 and (THh // 2) % _LANE == 0 and footprint(TM, THh) > budget:
        THh //= 2
    while TM > 128 and footprint(TM, THh) > budget:
        TM //= 2

    M_pad = _round_up(M, TM)
    h_p = h_bf if M_pad == M else jnp.pad(h_bf, ((0, M_pad - M), (0, 0)))

    grid = (M_pad // TM, Hh // THh)

    cost = pl.CostEstimate(
        flops=2 * M_pad * H * Hh + 2 * M_pad * Hh * DV_PAD,
        transcendentals=0,
        bytes_accessed=(M_pad * H * 2
                        + (M_pad // TM) * H * Hh * 2       # w1 re-streamed
                        + (M_pad // TM) * Hh * DV_PAD * 4  # w2 re-streamed
                        + M_pad * DV_PAD * 4),
    )

    values = pl.pallas_call(
        _value_head_kernel,
        out_shape=jax.ShapeDtypeStruct((M_pad, DV_PAD), jnp.float32),
        grid=grid,
        in_specs=[
            pl.BlockSpec((TM, H), lambda i, j: (i, 0)),
            pl.BlockSpec((H, THh), lambda i, j: (0, j)),
            pl.BlockSpec((1, THh), lambda i, j: (0, j)),
            pl.BlockSpec((THh, DV_PAD), lambda i, j: (j, 0)),
            pl.BlockSpec((1, DV_PAD), lambda i, j: (0, 0)),
        ],
        out_specs=pl.BlockSpec((TM, DV_PAD), lambda i, j: (i, 0)),
        compiler_params=pltpu.CompilerParams(
            dimension_semantics=("parallel", "arbitrary"),
            vmem_limit_bytes=int(budget),
        ),
        cost_estimate=cost,
    )(h_p, w1_bf, b1_2d, w2_pad, b2_pad)

    return values[:M, :value_dim]


# ------------------------------ forward -------------------------------------

def rpt_model_forward(input_ids, params):
    """Mirror of RPTModel.forward (return_dict=True, no output_hidden_states)."""
    # "base_model" stand-in: bf16 embedding lookup produces last_hidden_state.
    hidden_states = params["embedding"][input_ids]          # [B, S, H] bf16
    B, S, H = hidden_states.shape
    h_flat = hidden_states.reshape(B * S, H)

    logits = lm_head_pallas(h_flat, params["w_lm_bf16"],
                            vocab_size=params["vocab_size"])
    values = value_head_pallas(h_flat, params["w1_bf16"], params["b1"],
                               params["w2_pad"], params["b2_pad"],
                               value_dim=params["value_head_dim"])

    return {
        "logits": logits.reshape(B, S, params["vocab_size"]),
        "hidden_states": hidden_states,
        "values": values.reshape(B, S, params["value_head_dim"]),
    }


def init_params(key, vocab_size, hidden_size, value_head_dim=1):
    k_emb, k_lm, k_w1, k_w2 = jax.random.split(key, 4)
    half = hidden_size // 2

    # Embedding table for the stand-in base model (stored bf16: feeds the bf16
    # MXU path directly, no per-call convert).
    embedding = jax.random.normal(k_emb, (vocab_size, hidden_size),
                                  jnp.float32).astype(jnp.bfloat16)

    # lm_head: nn.Linear(H, V, bias=False); stored pre-transposed [H, V],
    # padded on the vocab axis and cast to bf16 ONCE here.
    bound = 1.0 / (hidden_size ** 0.5)
    w_lm = jax.random.uniform(k_lm, (hidden_size, vocab_size), jnp.float32,
                              minval=-bound, maxval=bound)
    w_lm_bf16 = prepare_lm_head_weight(w_lm)

    # value_head: weights ~ N(0, 0.01), biases = 0 (as in RPTModel.__init__).
    w1 = jax.random.normal(k_w1, (hidden_size, half), jnp.float32) * 0.01
    b1 = jnp.zeros((half,), jnp.float32)
    w2 = jax.random.normal(k_w2, (half, value_head_dim), jnp.float32) * 0.01
    b2 = jnp.zeros((value_head_dim,), jnp.float32)
    w1_bf, b1_2d, w2_pad, b2_pad = prepare_value_head_weights(w1, b1, w2, b2)

    return {
        "embedding": embedding,
        "w_lm_bf16": w_lm_bf16,
        "w1_bf16": w1_bf, "b1": b1_2d, "w2_pad": w2_pad, "b2_pad": b2_pad,
        "vocab_size": vocab_size, "value_head_dim": value_head_dim,
    }


if __name__ == "__main__":
    # Small, deterministic example shapes.
    B, S, H, V = 2, 8, 32, 128
    value_head_dim = 1

    key = jax.random.PRNGKey(0)
    k_params, k_ids = jax.random.split(key)
    params = init_params(k_params, vocab_size=V, hidden_size=H,
                         value_head_dim=value_head_dim)
    input_ids = jax.random.randint(k_ids, (B, S), 0, V, dtype=jnp.int32)

    outputs = rpt_model_forward(input_ids, params)
    jax.block_until_ready(outputs)

    # References mirror the kernels' bf16-input / f32-accumulate path.
    h = params["embedding"][input_ids]                      # [B, S, H] bf16
    h2 = h.reshape(B * S, H)
    w_lm_ref = params["w_lm_bf16"][:, :V]
    logits_ref = jnp.dot(h2, w_lm_ref,
                         preferred_element_type=jnp.float32).reshape(B, S, V)
    z_ref = jnp.maximum(
        jnp.dot(h2, params["w1_bf16"],
                preferred_element_type=jnp.float32) + params["b1"], 0.0)
    values_ref = (z_ref @ params["w2_pad"][:, :value_head_dim]
                  + params["b2_pad"][:, :value_head_dim]).reshape(
                      B, S, value_head_dim)

    assert outputs["logits"].shape == (B, S, V)
    assert outputs["values"].shape == (B, S, value_head_dim)
    assert outputs["hidden_states"].shape == (B, S, H)
    assert jnp.allclose(outputs["logits"], logits_ref, atol=2e-3, rtol=2e-2), \
        float(jnp.max(jnp.abs(outputs["logits"] - logits_ref)))
    assert jnp.allclose(outputs["values"], values_ref, atol=1e-4, rtol=1e-3), \
        float(jnp.max(jnp.abs(outputs["values"] - values_ref)))

    print("KERNEL_OK")
</pallas_src>

<mosaic_0001>
module attributes {stable_mosaic.version = 11 : i64} {
  func.func @_lm_head_kernel(%arg0: i32, %arg1: i32, %arg2: memref<16x32xbf16, #tpu.memory_space<vmem>>, %arg3: memref<32x128xbf16, #tpu.memory_space<vmem>>, %arg4: memref<16x128xf32, #tpu.memory_space<vmem>>) attributes {dimension_semantics = [#tpu.dimension_semantics<parallel>, #tpu.dimension_semantics<parallel>], iteration_bounds = array<i64: 1, 1>, scalar_prefetch = 0 : i64, scratch_operands = 0 : i64, tpu.core_type = #tpu.core_type<tc>, window_params = [{transform_indices = @transform_0, window_bounds = array<i64: 16, 32>}, {transform_indices = @transform_1, window_bounds = array<i64: 32, 128>}, {transform_indices = @transform_2, window_bounds = array<i64: 16, 128>}]} {
    %c0 = arith.constant 0 : index
    %c0_0 = arith.constant 0 : index
    %0 = vector.load %arg2[%c0, %c0_0] : memref<16x32xbf16, #tpu.memory_space<vmem>>, vector<16x32xbf16>
    %c0_1 = arith.constant 0 : index
    %c0_2 = arith.constant 0 : index
    %1 = vector.load %arg3[%c0_1, %c0_2] : memref<32x128xbf16, #tpu.memory_space<vmem>>, vector<32x128xbf16>
    %cst = arith.constant dense<0.000000e+00> : vector<16x128xf32>
    %2 = tpu.matmul %0, %1, %cst {dimension_numbers = #tpu.dot_dimension_numbers<[1], [0], [0], [1], [0, 0, 1, 1], [], []>} : vector<16x32xbf16>, vector<32x128xbf16>, vector<16x128xf32> -> vector<16x128xf32>
    %c0_3 = arith.constant 0 : index
    %c0_4 = arith.constant 0 : index
    %3 = vector.load %arg4[%c0_3, %c0_4] : memref<16x128xf32, #tpu.memory_space<vmem>>, vector<16x128xf32>
    tpu.vector_store %arg4[%c0_3, %c0_4], %2 {strides = array<i32>} : memref<16x128xf32, #tpu.memory_space<vmem>>, vector<16x128xf32>,
    return
  }
  func.func @transform_0(%arg0: i32, %arg1: i32) -> (i32, i32) {
    %c0_i32 = arith.constant 0 : i32
    %c0_i32_0 = arith.constant 0 : i32
    return %arg0, %c0_i32 : i32, i32
  }
  func.func @transform_1(%arg0: i32, %arg1: i32) -> (i32, i32) {
    %c0_i32 = arith.constant 0 : i32
    %c0_i32_0 = arith.constant 0 : i32
    return %c0_i32, %arg1 : i32, i32
  }
  func.func @transform_2(%arg0: i32, %arg1: i32) -> (i32, i32) {
    %c0_i32 = arith.constant 0 : i32
    return %arg0, %arg1 : i32, i32
  }
}

</mosaic_0001>

<llo_original>
// kernel: tpu_custom_call.1
$region0: #{tpu_custom_call.1}
  #allocation0 [shape = 'u32[]', space=smem, size = 0x4, offset = 0x4, fixed_abs, tag = 'smem constant byte address 0x4 - core index']
  #allocation1 [shape = 'u32[144,128]{1,0:T(1,128)}', space=vmem, size = 0x12000, scoped, tag = 'internal scratch']
  %s0 = inlined_call_operand.hbm [shape: bf16[16,32], index: 0, kind: input, shape index: {}]
  %s1 = inlined_call_operand.hbm [shape: bf16[32,128], index: 1, kind: input, shape index: {}]
  %s2 = inlined_call_operand.hbm [shape: f32[16,128], index: 2, kind: output, shape index: {}]
  %s3 = sld [smem:[#allocation0]]
  $region26: #{tpu_custom_call.1} parent=0
    _
  %s5 = ssub.s32 1, %s3
  %s6 = scalar_select 0, %s5, %s3
  $region1: #{tpu_custom_call.1} parent=0
    #allocation2 [shape = 'u8[4096]{0}', space=vmem, size = 0x1000, scoped, tag = 'input window, operand 0, single buffered']
    #allocation3 [shape = 's32[1]{0}', space=sflag, size = 0x4, scoped, tag = 'scoped memory for tpu_custom_call.1']
    #allocation4 [shape = 's32[1]{0}', space=sflag, size = 0x4, scoped, tag = 'scoped memory for tpu_custom_call.1']
    #allocation5 [shape = 'u8[8192]{0}', space=vmem, size = 0x2000, scoped, tag = 'input window, operand 1, single buffered']
    #allocation6 [shape = 's32[1]{0}', space=sflag, size = 0x4, scoped, tag = 'scoped memory for tpu_custom_call.1']
    #allocation7 [shape = 'u8[8192]{0}', space=vmem, size = 0x2000, scoped, tag = 'output window, operand 0, single buffered']
    %7 = vsyncpa [#allocation3], 0
    %8 = vsyncpa [#allocation6], 0
    %9 = vsyncpa [#allocation4], 0
    // Predicated region
    $region2: #{tpu_custom_call.1} parent=1 // pred_check
      _
    $region3: #{tpu_custom_call.1} parent=1 // pred_check_branch
      %11 = sbr.rel (0) target = $region5
    $region4: #{tpu_custom_call.1} parent=1 // pred_region
      %s13 = ssub.s32 128, 128
      %14 = vsyncadd [#allocation3], %s13
      %s15 = sshll.u32 [#allocation2], 4
      %s16 = int_to_ptr.vmem [resolvable:$true] %s15
      %21 = dma.hbm_to_vmem [thread:$0]  %s0, 128, %s16, [#allocation3], 64, 64, 4
    $region5: #{tpu_custom_call.1} parent=1 // pred_fallthru
      _
    // Predicated region
    $region6: #{tpu_custom_call.1} parent=1 // pred_check
      _
    $region7: #{tpu_custom_call.1} parent=1 // pred_check_branch
      %23 = sbr.rel (0) target = $region9
    $region8: #{tpu_custom_call.1} parent=1 // pred_region
      %s25 = ssub.s32 256, 256
      %26 = vsyncadd [#allocation6], %s25
      %s27 = sshll.u32 [#allocation5], 4
      %s28 = int_to_ptr.vmem [resolvable:$true] %s27
      %33 = dma.hbm_to_vmem [thread:$0]  %s1, 256, %s28, [#allocation6], 64, 64, 4
    $region9: #{tpu_custom_call.1} parent=1 // pred_fallthru
      _
    // Predicated region
    $region10: #{tpu_custom_call.1} parent=1 // pred_check
      _
    $region11: #{tpu_custom_call.1} parent=1 // pred_check_branch
      %35 = sbr.rel (0) target = $region13
    $region12: #{tpu_custom_call.1} parent=1 // pred_region
      %36 = dma.done [#allocation3], 128
    $region13: #{tpu_custom_call.1} parent=1 // pred_fallthru
      _
    // Predicated region
    $region14: #{tpu_custom_call.1} parent=1 // pred_check
      _
    $region15: #{tpu_custom_call.1} parent=1 // pred_check_branch
      %38 = sbr.rel (0) target = $region17
    $region16: #{tpu_custom_call.1} parent=1 // pred_region
      %39 = dma.done [#allocation6], 256
    $region17: #{tpu_custom_call.1} parent=1 // pred_fallthru
      _
    %v41 = vld [vmem:[#allocation2] sm:$0xf]
    %v42 = vld [vmem:[#allocation2 + $0x4] sm:$0xf]
    %v43 = vld [vmem:[#allocation5] sm:$0xf]
    %v44 = vld [vmem:[#allocation5 + $0x4] sm:$0xf]
    %v45 = vld [vmem:[#allocation5 + $0x8] sm:$0xf]
    %v46 = vld [vmem:[#allocation5 + $0xc] sm:$0xf]
    %v49 = vunpack.c.l.b16 %v41
    %v50 = vunpack.c.l.b16 %v42
    %v51 = vpack.c.b16 %v50, %v49
    %v56 = vunpack.c.l.b16 %v43
    %v57 = vunpack.c.l.b16 %v44
    %v58 = vunpack.c.l.b16 %v45
    %v59 = vunpack.c.l.b16 %v46
    %v60 = vpack.c.b16 %v57, %v56
    %v61 = vpack.c.b16 %v59, %v58
    %vm64 = vcmask 261120
    %v66 = vsel %vm64, %v51, 0
    %68 = vmatprep.subr.bf16.mxu0 0
    %69 = vmatpush1.bf16.msra.mxu0 %v60
    %70 = vmatprep.subr.bf16.mxu0 0
    %71 = vmatpush1.bf16.msra.mxu0 %v61
    %72 = vmatprep.subr.bf16.mxu0 0
    %73 = vmatpush1.bf16.msra.mxu0 0
    %74 = vmatprep.subr.bf16.mxu0 0
    %75 = vmatpush1.bf16.msra.mxu0 0
    %76 = vmatprep.subr.bf16.mxu0 0
    %77 = vmatpush1.bf16.msra.mxu0 0
    %78 = vmatprep.subr.bf16.mxu0 0
    %79 = vmatpush1.bf16.msra.mxu0 0
    %80 = vmatprep.subr.bf16.mxu0 0
    %81 = vmatpush1.bf16.msra.mxu0 0
    %82 = vmatprep.subr.bf16.mxu0 0
    %83 = vmatpush1.bf16.msra.mxu0 0
    %84 = vmatprep.subr.bf16.mxu0 0
    %85 = vmatpush1.bf16.msra.mxu0 0
    %86 = vmatprep.subr.bf16.mxu0 0
    %87 = vmatpush1.bf16.msra.mxu0 0
    %88 = vmatprep.subr.bf16.mxu0 0
    %89 = vmatpush1.bf16.msra.mxu0 0
    %90 = vmatprep.subr.bf16.mxu0 0
    %91 = vmatpush1.bf16.msra.mxu0 0
    %92 = vmatprep.subr.bf16.mxu0 0
    %93 = vmatpush1.bf16.msra.mxu0 0
    %94 = vmatprep.subr.bf16.mxu0 0
    %95 = vmatpush1.bf16.msra.mxu0 0
    %96 = vmatprep.subr.bf16.mxu0 0
    %97 = vmatpush1.bf16.msra.mxu0 0
    %98 = vmatprep.subr.bf16.mxu0 0
    %99 = vmatpush1.bf16.msra.mxu0 0
    %100 = vmatprep.mubr.bf16.mxu0 0
    %101 = vmatmul.mubr.bf16.gmra.mrb[0].mxu0 %v66
    %v102 = vpop.f32.mrb[0].mxu0
    %v103 = vadd.f32 0.0, %v102
    %v104 = vpop.f32.mrb[0].mxu0
    %v105 = vpop.f32.mrb[0].mxu0
    %v106 = vadd.f32 0.0, %v105
    %v107 = vpop.f32.mrb[0].mxu0
    %108 = vdwg.mxu0
    %109 = vst [vmem:[#allocation7] sm:$0xff] %v103
    %110 = vst [vmem:[#allocation7 + $0x8] sm:$0xff] %v106
    // Predicated region
    $region18: #{tpu_custom_call.1} parent=1 // pred_check
      _
    $region19: #{tpu_custom_call.1} parent=1 // pred_check_branch
      %112 = sbr.rel (0) target = $region21
    $region20: #{tpu_custom_call.1} parent=1 // pred_region
      %s114 = ssub.s32 256, 256
      %115 = vsyncadd [#allocation4], %s114
      %s116 = sshll.u32 [#allocation7], 4
      %s117 = int_to_ptr.vmem [resolvable:$true] %s116
      %122 = dma.vmem_to_hbm [thread:$0]  %s117, 256, %s2, [#allocation4], 128, 128, 8
    $region21: #{tpu_custom_call.1} parent=1 // pred_fallthru
      _
    // Predicated region
    $region22: #{tpu_custom_call.1} parent=1 // pred_check
      _
    $region23: #{tpu_custom_call.1} parent=1 // pred_check_branch
      %124 = sbr.rel (0) target = $region25
    $region24: #{tpu_custom_call.1} parent=1 // pred_region
      %125 = dma.done [#allocation4], 256
    $region25: #{tpu_custom_call.1} parent=1 // pred_fallthru
      _
    %126 = vsyncpa [#allocation3], 1
    %127 = vsyncpa [#allocation6], 1
    %128 = vsyncpa [#allocation4], 1

</llo_original>
